<compile_context>
chip_gen: v5e
topology: v5e:2x2
jax: 0.10.0
libtpu: 0.0.40
codegen_flags: <defaults>
</compile_context>

<pallas_src>
import jax
import jax.numpy as jnp
from jax.experimental import pallas as pl
from jax.experimental.pallas import tpu as pltpu


def _broadcast_add_kernel(x_ref, off_ref, o_ref):
    # x_ref / o_ref: (t_rows, t_hw) lane-dense tile; off_ref: (t_rows, 1) offsets.
    o_ref[...] = x_ref[...] + off_ref[...].astype(x_ref.dtype)


def _generation_defaults():
    """(target_block_bytes, vmem_limit_bytes) tuned per TPU generation."""
    try:
        kind = jax.devices()[0].device_kind.lower()
    except Exception:  # pragma: no cover - be robust to odd environments
        kind = ""
    if "v7" in kind:
        # 3.2 TB/s HBM: amortize the ~0.35us/step overhead with big blocks;
        # 4 live tiles (in+out, double-buffered) = 16 MiB << 64 MiB physical.
        return 4 << 20, 48 << 20
    if "v6" in kind:
        # Measured sweep: 4 MiB-class tiles ~86-90% of roofline; fits 32 MiB.
        return 4 << 20, 32 << 20
    # v5e & fallback: 1-2 MiB already sits near the knee at ~0.82 TB/s.
    return 2 << 20, 32 << 20


def condition_embedding_forward(x, conditions, embeddings, *,
                                target_block_bytes=None,
                                vmem_limit_bytes=None,
                                in_place=False):
    """x: (B, C, H, W), conditions: (B, V), embeddings: (V, C) -> (B, C, H, W)."""
    B, C, H, W = x.shape
    V, C2 = embeddings.shape
    assert C2 == C and conditions.shape == (B, V)

    gen_block, gen_vmem = _generation_defaults()
    if target_block_bytes is None:
        target_block_bytes = gen_block
    if vmem_limit_bytes is None:
        vmem_limit_bytes = gen_vmem

    HW = H * W
    rows = B * C
    itemsize = jnp.dtype(x.dtype).itemsize
    # Sublane packing: 8 rows for 32-bit, 16 for bf16, 32 for 8-bit dtypes.
    sub = max(8, 32 // itemsize)

    # Free (row-major contiguous) reshape to one dense row axis x lane axis.
    x2 = x.reshape(rows, HW)

    # Tiny O(B*V*C) reduction == exact mean over the vocab axis, hoisted out of
    # the memory-bound kernel.  Shaped (B*C, 1) so rows sit on sublanes and the
    # in-kernel add broadcasts across lanes with no transpose/relayout.
    offsets = (
        jnp.dot(
            conditions.astype(jnp.float32),
            embeddings.astype(jnp.float32),
            preferred_element_type=jnp.float32,
        )
        * (1.0 / float(V))
    ).reshape(rows, 1)

    # ---- Tile sizing -------------------------------------------------------
    budget_elems = max(1, target_block_bytes // itemsize)

    # Lane (spatial) tile: full extent when it fits the budget at the minimum
    # row count, otherwise the largest multiple of 128 that fits.
    if HW <= 128 or HW * sub <= budget_elems:
        t_hw = HW  # full extent is always legal w.r.t. the (8,128) rule
    else:
        t_hw = max(128, min((budget_elems // sub) // 128 * 128, (HW // 128) * 128))

    # Row tile: fill the remaining byte budget in multiples of `sub`, or the
    # full row extent (always legal) when rows are small.
    if rows <= sub:
        t_rows = rows
    else:
        want = max(sub, budget_elems // max(1, t_hw))
        t_rows = min(rows, max(sub, (want // sub) * sub))

    # Make sure larger tensors expose enough grid steps for dual-TC sharding
    # and double-buffer overlap; leave tiny tensors as a single block.
    total_bytes = rows * HW * itemsize
    MIN_STEPS = 8
    if total_bytes >= (4 << 20):
        while pl.cdiv(rows, t_rows) * pl.cdiv(HW, t_hw) < MIN_STEPS:
            if t_hw >= 256:
                t_hw = max(128, ((t_hw // 2) // 128) * 128)
            elif t_rows >= 2 * sub:
                t_rows = max(sub, ((t_rows // 2) // sub) * sub)
            else:
                break

    n_rows = pl.cdiv(rows, t_rows)
    n_hw = pl.cdiv(HW, t_hw)

    out2 = pl.pallas_call(
        _broadcast_add_kernel,
        out_shape=jax.ShapeDtypeStruct((rows, HW), x.dtype),
        grid_spec=pltpu.PrefetchScalarGridSpec(
            num_scalar_prefetch=0,
            grid=(n_rows, n_hw),
            in_specs=[
                pl.BlockSpec((t_rows, t_hw), lambda r, s: (r, s)),
                # Constant along the spatial axis -> stays resident in VMEM.
                pl.BlockSpec((t_rows, 1), lambda r, s: (r, 0)),
            ],
            out_specs=pl.BlockSpec((t_rows, t_hw), lambda r, s: (r, s)),
        ),
        compiler_params=pltpu.CompilerParams(
            dimension_semantics=("parallel", "parallel"),
            vmem_limit_bytes=vmem_limit_bytes,
        ),
        # Only the kernel's own work: one add per element, x read + out write
        # plus the small f32 offset read.  The hoisted matmul is XLA's.
        cost_estimate=pl.CostEstimate(
            flops=rows * HW,
            transcendentals=0,
            bytes_accessed=2 * rows * HW * itemsize + rows * 4,
        ),
        input_output_aliases=({0: 0} if in_place else {}),
    )(x2, offsets)

    return out2.reshape(B, C, H, W)


if __name__ == "__main__":
    # Small shapes consistent with the module: batch=2, embed_dim(channels)=4,
    # spatial=16x16, num_vocab=8.
    B, C, H, W, V = 2, 4, 16, 16, 8

    key = jax.random.PRNGKey(0)
    kx, kc, ke = jax.random.split(key, 3)

    x = jax.random.normal(kx, (B, C, H, W), dtype=jnp.float32)
    conditions = jax.random.normal(kc, (B, V), dtype=jnp.float32)
    # nn.init.normal_ -> standard normal, deterministic via PRNGKey
    embeddings = jax.random.normal(ke, (V, C), dtype=jnp.float32)

    out = condition_embedding_forward(x, conditions, embeddings)
    out = jax.block_until_ready(out)

    # Pure-JAX reference check (mirrors the PyTorch expression exactly).
    ref = x + (embeddings[None, :, :] * conditions[:, :, None]).mean(axis=1)[:, :, None, None]
    assert jnp.allclose(out, ref, atol=1e-5, rtol=1e-5), "mismatch vs reference"

    print("KERNEL_OK")
</pallas_src>

<mosaic_0001>
module attributes {stable_mosaic.version = 11 : i64} {
  func.func @_broadcast_add_kernel(%arg0: i32, %arg1: i32, %arg2: memref<8x256xf32, #tpu.memory_space<vmem>>, %arg3: memref<8x1xf32, #tpu.memory_space<vmem>>, %arg4: memref<8x256xf32, #tpu.memory_space<vmem>>) attributes {dimension_semantics = [#tpu.dimension_semantics<parallel>, #tpu.dimension_semantics<parallel>], iteration_bounds = array<i64: 1, 1>, scalar_prefetch = 0 : i64, scratch_operands = 0 : i64, tpu.core_type = #tpu.core_type<tc>, window_params = [{transform_indices = @transform_0, window_bounds = array<i64: 8, 256>}, {transform_indices = @transform_1, window_bounds = array<i64: 8, 1>}, {transform_indices = @transform_2, window_bounds = array<i64: 8, 256>}]} {
    %c0 = arith.constant 0 : index
    %c0_0 = arith.constant 0 : index
    %0 = vector.load %arg2[%c0, %c0_0] : memref<8x256xf32, #tpu.memory_space<vmem>>, vector<8x256xf32>
    %c0_1 = arith.constant 0 : index
    %c0_2 = arith.constant 0 : index
    %1 = vector.load %arg3[%c0_1, %c0_2] : memref<8x1xf32, #tpu.memory_space<vmem>>, vector<8x1xf32>
    %2 = vector.broadcast %1 : vector<8x1xf32> to vector<8x256xf32>
    %3 = arith.addf %0, %2 : vector<8x256xf32>
    %c0_3 = arith.constant 0 : index
    %c0_4 = arith.constant 0 : index
    %4 = vector.load %arg4[%c0_3, %c0_4] : memref<8x256xf32, #tpu.memory_space<vmem>>, vector<8x256xf32>
    tpu.vector_store %arg4[%c0_3, %c0_4], %3 {strides = array<i32>} : memref<8x256xf32, #tpu.memory_space<vmem>>, vector<8x256xf32>,
    return
  }
  func.func @transform_0(%arg0: i32, %arg1: i32) -> (i32, i32) {
    %c0_i32 = arith.constant 0 : i32
    return %arg0, %arg1 : i32, i32
  }
  func.func @transform_1(%arg0: i32, %arg1: i32) -> (i32, i32) {
    %c0_i32 = arith.constant 0 : i32
    %c0_i32_0 = arith.constant 0 : i32
    return %arg0, %c0_i32 : i32, i32
  }
  func.func @transform_2(%arg0: i32, %arg1: i32) -> (i32, i32) {
    %c0_i32 = arith.constant 0 : i32
    return %arg0, %arg1 : i32, i32
  }
}

</mosaic_0001>

<llo_original>
// kernel: tpu_custom_call.1
$region0: #{tpu_custom_call.1}
  #allocation0 [shape = 'u32[]', space=smem, size = 0x4, offset = 0x4, fixed_abs, tag = 'smem constant byte address 0x4 - core index']
  #allocation1 [shape = 'u32[72,128]{1,0:T(1,128)}', space=vmem, size = 0x9000, scoped, tag = 'internal scratch']
  %s0 = inlined_call_operand.hbm [shape: f32[8,256], index: 0, kind: input, shape index: {}]
  %s1 = inlined_call_operand.vmem [shape: f32[8,1], index: 1, kind: input, shape index: {}]
  %s2 = inlined_call_operand.hbm [shape: f32[8,256], index: 2, kind: output, shape index: {}]
  %s3 = sld [smem:[#allocation0]]
  $region22: #{tpu_custom_call.1} parent=0
    _
  %s5 = ssub.s32 1, %s3
  %s6 = scalar_select 0, %s5, %s3
  $region1: #{tpu_custom_call.1} parent=0
    #allocation2 [shape = 'u8[8192]{0}', space=vmem, size = 0x2000, scoped, tag = 'input window, operand 0, single buffered']
    #allocation3 [shape = 's32[1]{0}', space=sflag, size = 0x4, scoped, tag = 'scoped memory for tpu_custom_call.1']
    #allocation4 [shape = 's32[1]{0}', space=sflag, size = 0x4, scoped, tag = 'scoped memory for tpu_custom_call.1']
    #allocation5 [shape = 'u8[8192]{0}', space=vmem, size = 0x2000, scoped, tag = 'output window, operand 0, single buffered']
    %7 = vsyncpa [#allocation3], 0
    %8 = vsyncpa [#allocation4], 0
    // Predicated region
    $region2: #{tpu_custom_call.1} parent=1 // pred_check
      _
    $region3: #{tpu_custom_call.1} parent=1 // pred_check_branch
      %10 = sbr.rel (0) target = $region5
    $region4: #{tpu_custom_call.1} parent=1 // pred_region
      %12 = vsyncadd [#allocation3], 0
      %s14 = sshll.u32 %s0, 4
      %s15 = int_to_ptr.hbm [resolvable:$true] %s14
      %s16 = sshll.u32 [#allocation2], 4
      %s17 = int_to_ptr.vmem [resolvable:$true] %s16
      %19 = dma.hbm_to_vmem [thread:$0]  %s15, 256, %s17, [#allocation3]
    $region5: #{tpu_custom_call.1} parent=1 // pred_fallthru
      _
    // Predicated region
    $region6: #{tpu_custom_call.1} parent=1 // pred_check
      _
    $region7: #{tpu_custom_call.1} parent=1 // pred_check_branch
      %21 = sbr.rel (0) target = $region9
    $region8: #{tpu_custom_call.1} parent=1 // pred_region
      _
    $region9: #{tpu_custom_call.1} parent=1 // pred_fallthru
      _
    // Predicated region
    $region10: #{tpu_custom_call.1} parent=1 // pred_check
      _
    $region11: #{tpu_custom_call.1} parent=1 // pred_check_branch
      %23 = sbr.rel (0) target = $region13
    $region12: #{tpu_custom_call.1} parent=1 // pred_region
      %25 = dma.done [#allocation3], 256
    $region13: #{tpu_custom_call.1} parent=1 // pred_fallthru
      _
    %v26 = vld [vmem:[#allocation2] sm:$0xff]
    %v27 = vld [vmem:[#allocation2 + $0x8] sm:$0xff]
    %v28 = vld [vmem:[%s1] sm:$0xff]
    %30 = vset.pattern.permute.xlu0 0
    %31 = vperm.xlu0 %30, %v28
    %v32 = vpop.permute.xlu0 %31
    %v34 = vadd.f32 %v26, %v32
    %v35 = vadd.f32 %v27, %v32
    %36 = vst [vmem:[#allocation5] sm:$0xff] %v34
    %37 = vst [vmem:[#allocation5 + $0x8] sm:$0xff] %v35
    // Predicated region
    $region14: #{tpu_custom_call.1} parent=1 // pred_check
      _
    $region15: #{tpu_custom_call.1} parent=1 // pred_check_branch
      %39 = sbr.rel (0) target = $region17
    $region16: #{tpu_custom_call.1} parent=1 // pred_region
      %41 = vsyncadd [#allocation4], 0
      %s43 = sshll.u32 [#allocation5], 4
      %s44 = int_to_ptr.vmem [resolvable:$true] %s43
      %s45 = sshll.u32 %s2, 4
      %s46 = int_to_ptr.hbm [resolvable:$true] %s45
      %48 = dma.vmem_to_hbm [thread:$0]  %s44, 256, %s46, [#allocation4]
    $region17: #{tpu_custom_call.1} parent=1 // pred_fallthru
      _
    // Predicated region
    $region18: #{tpu_custom_call.1} parent=1 // pred_check
      _
    $region19: #{tpu_custom_call.1} parent=1 // pred_check_branch
      %50 = sbr.rel (0) target = $region21
    $region20: #{tpu_custom_call.1} parent=1 // pred_region
      %52 = dma.done [#allocation4], 256
    $region21: #{tpu_custom_call.1} parent=1 // pred_fallthru
      _
    %53 = vsyncpa [#allocation3], 1
    %54 = vsyncpa [#allocation4], 1

</llo_original>
